<compile_context>
chip_gen: v6e
topology: v6e:2x2x1
jax: 0.10.0
libtpu: 0.0.40
codegen_flags: <defaults>
</compile_context>

<pallas_src>
import jax
import jax.numpy as jnp
from jax.experimental import pallas as pl
from jax.experimental.pallas import tpu as pltpu

LEAKY_SLOPE = 0.01
BN_EPS = 1e-5


def lte_kernel(x_ref, w1_ref, b1_ref, w2_ref, b2_ref, avg_ref, rep_ref, o_ref):
    # x_ref: (C, TILE_T * V) lane-dense slice of one batch element.
    x = x_ref[...]

    # Mean over V via a constant block-averaging matrix on the MXU (avoids an
    # in-VMEM (C, T*V) -> (C, T, V) reshape copy and XLU lane reductions).
    pooled = jnp.dot(x, avg_ref[...],
                     preferred_element_type=jnp.float32)            # (C, TILE_T)

    # Squeeze 1x1 conv; eval-mode BN scale is pre-folded into w1, bias into b1.
    h = jnp.dot(w1_ref[...], pooled,
                preferred_element_type=jnp.float32) + b1_ref[...]   # (H, TILE_T)
    h = jnp.where(h >= 0, h, LEAKY_SLOPE * h)                       # LeakyReLU

    # Expand 1x1 conv + sigmoid gate.
    s = jnp.dot(w2_ref[...], h,
                preferred_element_type=jnp.float32) + b2_ref[...]   # (C, TILE_T)
    g = jax.nn.sigmoid(s)                                           # (C, TILE_T)

    # Broadcast the gate over V with a constant 0/1 repeat matrix (MXU, stays
    # lane-dense), then excite the original input in its native dtype.
    gate = jnp.dot(g, rep_ref[...],
                   preferred_element_type=jnp.float32)              # (C, TILE_T*V)
    o_ref[...] = (x * gate.astype(x.dtype)).astype(o_ref.dtype)


def _choose_tile_t(T, V, C, itemsize, target_block_bytes=2 * 1024 * 1024):
    """Largest divisor of T whose lane tile (tile_t*V) is a multiple of 128
    (or the full T*V axis) and whose (C, tile_t*V) block fits the target size."""
    candidates = [t for t in range(1, T + 1)
                  if T % t == 0 and ((t * V) % 128 == 0 or t == T)]
    fitting = [t for t in candidates if C * t * V * itemsize <= target_block_bytes]
    return max(fitting) if fitting else min(candidates)


def long_term_excitation(x, params):
    """x: (N, C, T, V). params: dict of kernel weights (see make_params)."""
    N, C, T, V = x.shape
    H = params["w1"].shape[0]
    L = T * V

    # Fold eval-mode BatchNorm1d into the squeeze conv:
    #   w1' = bn_scale * w1 ;  b1' = bn_scale * b1 + bn_bias
    inv_std = 1.0 / jnp.sqrt(params["bn_var"] + BN_EPS)
    bn_scale = params["bn_gamma"] * inv_std                          # (H,)
    bn_bias = params["bn_beta"] - params["bn_mean"] * bn_scale       # (H,)
    w1 = (bn_scale[:, None] * params["w1"]).astype(jnp.float32)      # (H, C)
    b1 = (bn_scale * params["b1"] + bn_bias).reshape(H, 1)           # (H, 1)
    w2 = params["w2"].astype(jnp.float32)                            # (C, H)
    b2 = params["b2"].reshape(C, 1)                                  # (C, 1)

    # Lane-dense view of x: (N, C, T*V). Free: NCTV is contiguous over (T, V).
    x2d = x.reshape(N, C, L)
    itemsize = jnp.dtype(x.dtype).itemsize
    tile_t = _choose_tile_t(T, V, C, itemsize)
    tile_l = tile_t * V
    num_t = L // tile_l

    # Constant pooling / broadcast matrices, built once in the wrapper.
    eye_t = jnp.eye(tile_t, dtype=jnp.float32)
    avg = (jnp.repeat(eye_t, V, axis=0) / float(V)).astype(x.dtype)  # (tile_l, tile_t)
    rep = jnp.repeat(eye_t, V, axis=1)                               # (tile_t, tile_l)

    def full2d(a):
        return pl.BlockSpec(a.shape, lambda n, t: (0, 0))

    # HBM-bound cost hint: read + write x once; flops are negligible.
    flops = 2 * N * T * (C * V + H * C + C * H + C * V) + N * C * L
    cost = pl.CostEstimate(
        flops=int(flops),
        transcendentals=int(N * C * T),                # sigmoid on the gate
        bytes_accessed=int(2 * N * C * L * itemsize),
    )

    out2d = pl.pallas_call(
        lte_kernel,
        out_shape=jax.ShapeDtypeStruct((N, C, L), x.dtype),
        grid=(N, num_t),
        in_specs=[
            pl.BlockSpec((None, C, tile_l), lambda n, t: (n, 0, t)),  # x (lane-dense)
            full2d(w1),                                                # folded W1
            full2d(b1),                                                # folded bias
            full2d(w2),                                                # W2
            full2d(b2),                                                # b2
            full2d(avg),                                               # V-average matrix
            full2d(rep),                                               # V-repeat matrix
        ],
        out_specs=pl.BlockSpec((None, C, tile_l), lambda n, t: (n, 0, t)),
        compiler_params=pltpu.CompilerParams(
            dimension_semantics=("parallel", "parallel"),
            vmem_limit_bytes=48 * 1024 * 1024),        # fits v7x's 64 MiB VMEM
        cost_estimate=cost,
    )(x2d, w1, b1, w2, b2, avg, rep)

    return out2d.reshape(N, C, T, V)


def reference(x, params):
    """Pure-JAX reference for correctness checking."""
    pooled = jnp.mean(x, axis=-1)                                    # (N, C, T)
    h = jnp.einsum("hc,nct->nht", params["w1"], pooled) + params["b1"][None, :, None]
    inv_std = 1.0 / jnp.sqrt(params["bn_var"] + BN_EPS)
    h = (h - params["bn_mean"][None, :, None]) * inv_std[None, :, None]
    h = h * params["bn_gamma"][None, :, None] + params["bn_beta"][None, :, None]
    h = jnp.where(h >= 0, h, LEAKY_SLOPE * h)
    w = jnp.einsum("ch,nht->nct", params["w2"], h) + params["b2"][None, :, None]
    w = jax.nn.sigmoid(w)
    return x * w[..., None]


def make_params(key, C):
    H = C // 16
    k1, k2, k3, k4 = jax.random.split(key, 4)
    return {
        # Conv1d weights (kernel_size=1) stored as 2-D matrices.
        "w1": jax.random.normal(k1, (H, C), jnp.float32) * 0.1,
        "b1": jax.random.normal(k2, (H,), jnp.float32) * 0.1,
        "w2": jax.random.normal(k3, (C, H), jnp.float32) * 0.1,
        "b2": jax.random.normal(k4, (C,), jnp.float32) * 0.1,
        # BatchNorm1d parameters / running stats (eval mode).
        # TODO(synk): PyTorch default train-mode BN uses batch statistics;
        # here we use deterministic running stats (inference semantics).
        "bn_gamma": 1.0 + 0.10 * jnp.arange(H, dtype=jnp.float32),
        "bn_beta": 0.01 * jnp.arange(H, dtype=jnp.float32),
        "bn_mean": 0.05 * jnp.arange(H, dtype=jnp.float32),
        "bn_var": 1.0 + 0.02 * jnp.arange(H, dtype=jnp.float32),
    }


if __name__ == "__main__":
    key = jax.random.PRNGKey(0)
    kx, kp = jax.random.split(key)

    N, C, T, V = 2, 32, 16, 8          # in_planes = 32 -> hidden = 32 // 16 = 2
    x = jax.random.normal(kx, (N, C, T, V), jnp.float32)
    params = make_params(kp, C)

    ref = reference(x, params)

    out = long_term_excitation(x, params)
    out = jax.block_until_ready(out)

    assert out.shape == (N, C, T, V)
    assert jnp.allclose(out, ref, rtol=1e-4, atol=1e-3), "mismatch vs reference"

    print("KERNEL_OK")
</pallas_src>

<mosaic_0001>
module attributes {stable_mosaic.version = 11 : i64} {
  func.func @lte_kernel(%arg0: i32, %arg1: i32, %arg2: memref<1x32x128xf32, #tpu.memory_space<vmem>>, %arg3: memref<2x32xf32, #tpu.memory_space<vmem>>, %arg4: memref<2x1xf32, #tpu.memory_space<vmem>>, %arg5: memref<32x2xf32, #tpu.memory_space<vmem>>, %arg6: memref<32x1xf32, #tpu.memory_space<vmem>>, %arg7: memref<128x16xf32, #tpu.memory_space<vmem>>, %arg8: memref<16x128xf32, #tpu.memory_space<vmem>>, %arg9: memref<1x32x128xf32, #tpu.memory_space<vmem>>) attributes {dimension_semantics = [#tpu.dimension_semantics<parallel>, #tpu.dimension_semantics<parallel>], iteration_bounds = array<i64: 2, 1>, scalar_prefetch = 0 : i64, scratch_operands = 0 : i64, tpu.core_type = #tpu.core_type<tc>, window_params = [{transform_indices = @transform_0, window_bounds = array<i64: 1, 32, 128>}, {pipeline_mode = #tpu.pipeline_mode<synchronous>, transform_indices = @transform_1, window_bounds = array<i64: 2, 32>}, {pipeline_mode = #tpu.pipeline_mode<synchronous>, transform_indices = @transform_2, window_bounds = array<i64: 2, 1>}, {pipeline_mode = #tpu.pipeline_mode<synchronous>, transform_indices = @transform_3, window_bounds = array<i64: 32, 2>}, {pipeline_mode = #tpu.pipeline_mode<synchronous>, transform_indices = @transform_4, window_bounds = array<i64: 32, 1>}, {pipeline_mode = #tpu.pipeline_mode<synchronous>, transform_indices = @transform_5, window_bounds = array<i64: 128, 16>}, {pipeline_mode = #tpu.pipeline_mode<synchronous>, transform_indices = @transform_6, window_bounds = array<i64: 16, 128>}, {transform_indices = @transform_7, window_bounds = array<i64: 1, 32, 128>}]} {
    %c0 = arith.constant 0 : index
    %c0_0 = arith.constant 0 : index
    %c0_1 = arith.constant 0 : index
    %0 = vector.load %arg2[%c0, %c0_0, %c0_1] : memref<1x32x128xf32, #tpu.memory_space<vmem>>, vector<1x32x128xf32>
    %1 = vector.shape_cast %0 : vector<1x32x128xf32> to vector<32x128xf32>
    %c0_2 = arith.constant 0 : index
    %c0_3 = arith.constant 0 : index
    %2 = vector.load %arg7[%c0_2, %c0_3] : memref<128x16xf32, #tpu.memory_space<vmem>>, vector<128x16xf32>
    %cst = arith.constant dense<0.000000e+00> : vector<32x16xf32>
    %3 = tpu.matmul %1, %2, %cst {dimension_numbers = #tpu.dot_dimension_numbers<[1], [0], [0], [1], [0, 0, 1, 1], [], []>} : vector<32x128xf32>, vector<128x16xf32>, vector<32x16xf32> -> vector<32x16xf32>
    %c0_4 = arith.constant 0 : index
    %c0_5 = arith.constant 0 : index
    %4 = vector.load %arg3[%c0_4, %c0_5] : memref<2x32xf32, #tpu.memory_space<vmem>>, vector<2x32xf32>
    %cst_6 = arith.constant dense<0.000000e+00> : vector<2x16xf32>
    %5 = tpu.matmul %4, %3, %cst_6 {dimension_numbers = #tpu.dot_dimension_numbers<[1], [0], [0], [1], [0, 0, 1, 1], [], []>} : vector<2x32xf32>, vector<32x16xf32>, vector<2x16xf32> -> vector<2x16xf32>
    %c0_7 = arith.constant 0 : index
    %c0_8 = arith.constant 0 : index
    %6 = vector.load %arg4[%c0_7, %c0_8] : memref<2x1xf32, #tpu.memory_space<vmem>>, vector<2x1xf32>
    %7 = vector.broadcast %6 : vector<2x1xf32> to vector<2x16xf32>
    %8 = arith.addf %5, %7 : vector<2x16xf32>
    %cst_9 = arith.constant 0.000000e+00 : f32
    %9 = vector.broadcast %cst_9 : f32 to vector<2x16xf32>
    %10 = arith.cmpf oge, %8, %9 : vector<2x16xf32>
    %cst_10 = arith.constant 0.00999999977 : f32
    %11 = vector.broadcast %cst_10 : f32 to vector<2x16xf32>
    %12 = arith.mulf %11, %8 : vector<2x16xf32>
    %13 = arith.select %10, %8, %12 : vector<2x16xi1>, vector<2x16xf32>
    %c0_11 = arith.constant 0 : index
    %c0_12 = arith.constant 0 : index
    %14 = vector.load %arg5[%c0_11, %c0_12] : memref<32x2xf32, #tpu.memory_space<vmem>>, vector<32x2xf32>
    %cst_13 = arith.constant dense<0.000000e+00> : vector<32x16xf32>
    %15 = tpu.matmul %14, %13, %cst_13 {dimension_numbers = #tpu.dot_dimension_numbers<[1], [0], [0], [1], [0, 0, 1, 1], [], []>} : vector<32x2xf32>, vector<2x16xf32>, vector<32x16xf32> -> vector<32x16xf32>
    %c0_14 = arith.constant 0 : index
    %c0_15 = arith.constant 0 : index
    %16 = vector.load %arg6[%c0_14, %c0_15] : memref<32x1xf32, #tpu.memory_space<vmem>>, vector<32x1xf32>
    %17 = vector.broadcast %16 : vector<32x1xf32> to vector<32x16xf32>
    %18 = arith.addf %15, %17 : vector<32x16xf32>
    %19 = arith.negf %18 : vector<32x16xf32>
    %20 = math.exp %19 : vector<32x16xf32>
    %cst_16 = arith.constant 1.000000e+00 : f32
    %21 = vector.broadcast %cst_16 : f32 to vector<32x16xf32>
    %22 = arith.addf %21, %20 : vector<32x16xf32>
    %23 = arith.divf %21, %22 : vector<32x16xf32>
    %c0_17 = arith.constant 0 : index
    %c0_18 = arith.constant 0 : index
    %24 = vector.load %arg8[%c0_17, %c0_18] : memref<16x128xf32, #tpu.memory_space<vmem>>, vector<16x128xf32>
    %cst_19 = arith.constant dense<0.000000e+00> : vector<32x128xf32>
    %25 = tpu.matmul %23, %24, %cst_19 {dimension_numbers = #tpu.dot_dimension_numbers<[1], [0], [0], [1], [0, 0, 1, 1], [], []>} : vector<32x16xf32>, vector<16x128xf32>, vector<32x128xf32> -> vector<32x128xf32>
    %26 = arith.mulf %1, %25 : vector<32x128xf32>
    %c0_20 = arith.constant 0 : index
    %c0_21 = arith.constant 0 : index
    %c0_22 = arith.constant 0 : index
    %27 = vector.load %arg9[%c0_20, %c0_21, %c0_22] : memref<1x32x128xf32, #tpu.memory_space<vmem>>, vector<1x32x128xf32>
    %28 = vector.shape_cast %27 : vector<1x32x128xf32> to vector<32x128xf32>
    %29 = vector.shape_cast %26 : vector<32x128xf32> to vector<1x32x128xf32>
    tpu.vector_store %arg9[%c0_20, %c0_21, %c0_22], %29 {strides = array<i32>} : memref<1x32x128xf32, #tpu.memory_space<vmem>>, vector<1x32x128xf32>,
    return
  }
  func.func @transform_0(%arg0: i32, %arg1: i32) -> (i32, i32, i32) {
    %c0_i32 = arith.constant 0 : i32
    %c0_i32_0 = arith.constant 0 : i32
    return %arg0, %c0_i32, %arg1 : i32, i32, i32
  }
  func.func @transform_1(%arg0: i32, %arg1: i32) -> (i32, i32) {
    %c0_i32 = arith.constant 0 : i32
    %c0_i32_0 = arith.constant 0 : i32
    %c0_i32_1 = arith.constant 0 : i32
    return %c0_i32, %c0_i32_0 : i32, i32
  }
  func.func @transform_2(%arg0: i32, %arg1: i32) -> (i32, i32) {
    %c0_i32 = arith.constant 0 : i32
    %c0_i32_0 = arith.constant 0 : i32
    %c0_i32_1 = arith.constant 0 : i32
    return %c0_i32, %c0_i32_0 : i32, i32
  }
  func.func @transform_3(%arg0: i32, %arg1: i32) -> (i32, i32) {
    %c0_i32 = arith.constant 0 : i32
    %c0_i32_0 = arith.constant 0 : i32
    %c0_i32_1 = arith.constant 0 : i32
    return %c0_i32, %c0_i32_0 : i32, i32
  }
  func.func @transform_4(%arg0: i32, %arg1: i32) -> (i32, i32) {
    %c0_i32 = arith.constant 0 : i32
    %c0_i32_0 = arith.constant 0 : i32
    %c0_i32_1 = arith.constant 0 : i32
    return %c0_i32, %c0_i32_0 : i32, i32
  }
  func.func @transform_5(%arg0: i32, %arg1: i32) -> (i32, i32) {
    %c0_i32 = arith.constant 0 : i32
    %c0_i32_0 = arith.constant 0 : i32
    %c0_i32_1 = arith.constant 0 : i32
    return %c0_i32, %c0_i32_0 : i32, i32
  }
  func.func @transform_6(%arg0: i32, %arg1: i32) -> (i32, i32) {
    %c0_i32 = arith.constant 0 : i32
    %c0_i32_0 = arith.constant 0 : i32
    %c0_i32_1 = arith.constant 0 : i32
    return %c0_i32, %c0_i32_0 : i32, i32
  }
  func.func @transform_7(%arg0: i32, %arg1: i32) -> (i32, i32, i32) {
    %c0_i32 = arith.constant 0 : i32
    %c0_i32_0 = arith.constant 0 : i32
    return %arg0, %c0_i32, %arg1 : i32, i32, i32
  }
}

</mosaic_0001>

<llo_original>
// kernel: tpu_custom_call.1
$region0: #{tpu_custom_call.1}
  #allocation0 [shape = 'u32[]', space=smem, size = 0x4, offset = 0x4, fixed_abs, tag = 'smem constant byte address 0x4 - core index']
  #allocation1 [shape = 'u32[144,128]{1,0:T(1,128)}', space=vmem, size = 0x12000, scoped, tag = 'internal scratch']
  %s0 = inlined_call_operand.vmem [shape: f32[2,32,128], index: 0, kind: input, shape index: {}]
  %s1 = inlined_call_operand.vmem [shape: f32[2,32], index: 1, kind: input, shape index: {}]
  %s2 = inlined_call_operand.vmem [shape: f32[2,1], index: 2, kind: input, shape index: {}]
  %s3 = inlined_call_operand.vmem [shape: f32[32,2], index: 3, kind: input, shape index: {}]
  %s4 = inlined_call_operand.vmem [shape: f32[32,1], index: 4, kind: input, shape index: {}]
  %s5 = inlined_call_operand.vmem [shape: f32[128,16], index: 5, kind: input, shape index: {}]
  %s6 = inlined_call_operand.vmem [shape: f32[16,128], index: 6, kind: input, shape index: {}]
  %s7 = inlined_call_operand.hbm [shape: f32[2,32,128], index: 7, kind: output, shape index: {}]
  %s8 = sld [smem:[#allocation0]]
  $region61: #{tpu_custom_call.1} parent=0
    _
  %s10 = ssub.s32 1, %s8
  %s11 = scalar_select 0, %s10, %s8
  $region1: #{tpu_custom_call.1} parent=0
    #allocation2 [shape = 'u8[32768]{0}', space=vmem, size = 0x8000, scoped, tag = 'output window, operand 0']
    #allocation3 [shape = 's32[2]{0}', space=sflag, size = 0x8, scoped, tag = 'scoped memory for tpu_custom_call.1']
    %12 = vsyncpa [#allocation3], 0
    %s13 = scalar_lea.sflag [#allocation3], 1
    %14 = vsyncpa %s13, 0
    loop: start=0, step=1, limit=4
    $region2: #{tpu_custom_call.1} parent=1 // loop_pre_header
      _
    $region3: #{tpu_custom_call.1} parent=1 // loop_header
      %s16 = sphi 0, %s20
      %p17 = scmp.ge.s32.totalorder %s16, 4
      %s23 = sphi 0, %s35
      %s24 = sphi 0, %s31
      %s25 = sphi 0, %s23
      %s26 = sphi 0, %s24
      %s27 = sphi 0, %s25
      %s28 = sphi 0, %s26
      %s40 = sphi 0, %s42
      %s43 = sphi 0, %s40
      %s44 = sphi 0, %s43
      %s60 = sphi 0, %s44
      %s64 = sphi 0, %s64
      %s66 = sphi 0, %s64
      %s67 = sphi 0, %s66
      %s81 = sphi 0, %s67
      %s85 = sphi 0, %s85
      %s87 = sphi 0, %s85
      %s88 = sphi 0, %s87
      %s102 = sphi 0, %s88
      %s106 = sphi 0, %s106
      %s108 = sphi 0, %s106
      %s109 = sphi 0, %s108
      %s123 = sphi 0, %s109
      %s127 = sphi 0, %s127
      %s129 = sphi 0, %s127
      %s130 = sphi 0, %s129
      %s144 = sphi 0, %s130
      %s148 = sphi 0, %s148
      %s150 = sphi 0, %s148
      %s151 = sphi 0, %s150
      %s165 = sphi 0, %s151
      %s169 = sphi 0, %s169
      %s171 = sphi 0, %s169
      %s172 = sphi 0, %s171
      %s186 = sphi 0, %s172
      %s194 = sphi 0, %s196
      %s197 = sphi 0, %s194
      %s198 = sphi 0, %s197
      %s214 = sphi 0, %s198
    $region4: #{tpu_custom_call.1} parent=1 // loop_header_branch
      %19 = sbr.rel (%p17) target = $region8
    $region5: #{tpu_custom_call.1} parent=1 // loop_body
      %s21 = ssub.s32 %s16, 1
      %s22 = ssub.s32 %s16, 2
      %s29 = sadd.s32 1, %s24
      %p30 = scmp.ge.s32.totalorder %s29, 1
      %s31 = scalar_select %p30, 0, %s29
      %s32 = sadd.s32 1, %s23
      %s33 = scalar_select %p30, %s32, %s23
      %p34 = scmp.ge.s32.totalorder %s33, 2
      %s35 = scalar_select %p34, 0, %s33
      %s36 = ssub.s32 %s23, %s35
      %s37 = ssub.s32 %s24, %s31
      %s38 = sor.u32 %s36, %s37
      %p39 = scmp.eq.s32.totalorder %s38, 0
      %s41 = sadd.s32 %s40, 1
      %s42 = scalar_select %p39, %s40, %s41
      %p45 = pneg %p39
      %p46 = scmp.eq.s32.totalorder %s16, 1
      %p47 = por %p45, %p46
      %p48 = scmp.ne.s32.totalorder %s40, %s43
      %p49 = scmp.eq.s32.totalorder %s16, 0
      %p50 = por %p48, %p49
      %p51 = scmp.ne.s32.totalorder %s40, %s43
      %p52 = scmp.eq.s32.totalorder %s21, 1
      %p53 = por %p51, %p52
      %p54 = scmp.ne.s32.totalorder %s43, %s44
      %p55 = scmp.eq.s32.totalorder %s21, 0
      %p56 = por %p54, %p55
      %p57 = scmp.ne.s32.totalorder %s43, %s44
      %p58 = scmp.eq.s32.totalorder %s22, 1
      %p59 = por %p57, %p58
      %p61 = scmp.ne.s32.totalorder %s44, %s60
      %p62 = scmp.eq.s32.totalorder %s22, 0
      %p63 = por %p61, %p62
      %s65 = sadd.s32 %s64, 1
      %p68 = scmp.eq.s32.totalorder %s16, 1
      %p69 = scmp.ne.s32.totalorder %s64, %s66
      %p70 = scmp.eq.s32.totalorder %s16, 0
      %p71 = por %p69, %p70
      %p72 = scmp.ne.s32.totalorder %s64, %s66
      %p73 = scmp.eq.s32.totalorder %s21, 1
      %p74 = por %p72, %p73
      %p75 = scmp.ne.s32.totalorder %s66, %s67
      %p76 = scmp.eq.s32.totalorder %s21, 0
      %p77 = por %p75, %p76
      %p78 = scmp.ne.s32.totalorder %s66, %s67
      %p79 = scmp.eq.s32.totalorder %s22, 1
      %p80 = por %p78, %p79
      %p82 = scmp.ne.s32.totalorder %s67, %s81
      %p83 = scmp.eq.s32.totalorder %s22, 0
      %p84 = por %p82, %p83
      %s86 = sadd.s32 %s85, 1
      %p89 = scmp.eq.s32.totalorder %s16, 1
      %p90 = scmp.ne.s32.totalorder %s85, %s87
      %p91 = scmp.eq.s32.totalorder %s16, 0
      %p92 = por %p90, %p91
      %p93 = scmp.ne.s32.totalorder %s85, %s87
      %p94 = scmp.eq.s32.totalorder %s21, 1
      %p95 = por %p93, %p94
      %p96 = scmp.ne.s32.totalorder %s87, %s88
      %p97 = scmp.eq.s32.totalorder %s21, 0
      %p98 = por %p96, %p97
      %p99 = scmp.ne.s32.totalorder %s87, %s88
      %p100 = scmp.eq.s32.totalorder %s22, 1
      %p101 = por %p99, %p100
      %p103 = scmp.ne.s32.totalorder %s88, %s102
      %p104 = scmp.eq.s32.totalorder %s22, 0
      %p105 = por %p103, %p104
      %s107 = sadd.s32 %s106, 1
      %p110 = scmp.eq.s32.totalorder %s16, 1
      %p111 = scmp.ne.s32.totalorder %s106, %s108
      %p112 = scmp.eq.s32.totalorder %s16, 0
      %p113 = por %p111, %p112
      %p114 = scmp.ne.s32.totalorder %s106, %s108
      %p115 = scmp.eq.s32.totalorder %s21, 1
      %p116 = por %p114, %p115
      %p117 = scmp.ne.s32.totalorder %s108, %s109
      %p118 = scmp.eq.s32.totalorder %s21, 0
      %p119 = por %p117, %p118
      %p120 = scmp.ne.s32.totalorder %s108, %s109
      %p121 = scmp.eq.s32.totalorder %s22, 1
      %p122 = por %p120, %p121
      %p124 = scmp.ne.s32.totalorder %s109, %s123
      %p125 = scmp.eq.s32.totalorder %s22, 0
      %p126 = por %p124, %p125
      %s128 = sadd.s32 %s127, 1
      %p131 = scmp.eq.s32.totalorder %s16, 1
      %p132 = scmp.ne.s32.totalorder %s127, %s129
      %p133 = scmp.eq.s32.totalorder %s16, 0
      %p134 = por %p132, %p133
      %p135 = scmp.ne.s32.totalorder %s127, %s129
      %p136 = scmp.eq.s32.totalorder %s21, 1
      %p137 = por %p135, %p136
      %p138 = scmp.ne.s32.totalorder %s129, %s130
      %p139 = scmp.eq.s32.totalorder %s21, 0
      %p140 = por %p138, %p139
      %p141 = scmp.ne.s32.totalorder %s129, %s130
      %p142 = scmp.eq.s32.totalorder %s22, 1
      %p143 = por %p141, %p142
      %p145 = scmp.ne.s32.totalorder %s130, %s144
      %p146 = scmp.eq.s32.totalorder %s22, 0
      %p147 = por %p145, %p146
      %s149 = sadd.s32 %s148, 1
      %p152 = scmp.eq.s32.totalorder %s16, 1
      %p153 = scmp.ne.s32.totalorder %s148, %s150
      %p154 = scmp.eq.s32.totalorder %s16, 0
      %p155 = por %p153, %p154
      %p156 = scmp.ne.s32.totalorder %s148, %s150
      %p157 = scmp.eq.s32.totalorder %s21, 1
      %p158 = por %p156, %p157
      %p159 = scmp.ne.s32.totalorder %s150, %s151
      %p160 = scmp.eq.s32.totalorder %s21, 0
      %p161 = por %p159, %p160
      %p162 = scmp.ne.s32.totalorder %s150, %s151
      %p163 = scmp.eq.s32.totalorder %s22, 1
      %p164 = por %p162, %p163
      %p166 = scmp.ne.s32.totalorder %s151, %s165
      %p167 = scmp.eq.s32.totalorder %s22, 0
      %p168 = por %p166, %p167
      %s170 = sadd.s32 %s169, 1
      %p173 = scmp.eq.s32.totalorder %s16, 1
      %p174 = scmp.ne.s32.totalorder %s169, %s171
      %p175 = scmp.eq.s32.totalorder %s16, 0
      %p176 = por %p174, %p175
      %p177 = scmp.ne.s32.totalorder %s169, %s171
      %p178 = scmp.eq.s32.totalorder %s21, 1
      %p179 = por %p177, %p178
      %p180 = scmp.ne.s32.totalorder %s171, %s172
      %p181 = scmp.eq.s32.totalorder %s21, 0
      %p182 = por %p180, %p181
      %p183 = scmp.ne.s32.totalorder %s171, %s172
      %p184 = scmp.eq.s32.totalorder %s22, 1
      %p185 = por %p183, %p184
      %p187 = scmp.ne.s32.totalorder %s172, %s186
      %p188 = scmp.eq.s32.totalorder %s22, 0
      %p189 = por %p187, %p188
      %s190 = ssub.s32 %s23, %s35
      %s191 = ssub.s32 %s24, %s31
      %s192 = sor.u32 %s190, %s191
      %p193 = scmp.eq.s32.totalorder %s192, 0
      %s195 = sadd.s32 %s194, 1
      %s196 = scalar_select %p193, %s194, %s195
      %p199 = pneg %p193
      %p200 = scmp.eq.s32.totalorder %s16, 1
      %p201 = por %p199, %p200
      %p202 = scmp.ne.s32.totalorder %s194, %s197
      %p203 = scmp.eq.s32.totalorder %s16, 0
      %p204 = por %p202, %p203
      %p205 = scmp.ne.s32.totalorder %s194, %s197
      %p206 = scmp.eq.s32.totalorder %s21, 1
      %p207 = por %p205, %p206
      %p208 = scmp.ne.s32.totalorder %s197, %s198
      %p209 = scmp.eq.s32.totalorder %s21, 0
      %p210 = por %p208, %p209
      %p211 = scmp.ne.s32.totalorder %s197, %s198
      %p212 = scmp.eq.s32.totalorder %s22, 1
      %p213 = por %p211, %p212
      %p215 = scmp.ne.s32.totalorder %s198, %s214
      %p216 = scmp.eq.s32.totalorder %s22, 0
      %p217 = por %p215, %p216
      %p218 = scmp.le.s32.totalorder 1, %s16
      %p219 = scmp.lt.s32.totalorder %s16, 3
      %p220 = pnand %p218, %p219
      %p221 = pneg %p220
      // Predicated region
      $region9: #{tpu_custom_call.1} parent=5 // pred_check
        _
      $region10: #{tpu_custom_call.1} parent=5 // pred_check_branch
        %223 = sbr.rel (%p220) target = $region12
      $region11: #{tpu_custom_call.1} parent=5 // pred_region
        %s224 = ssub.s32 %s16, 1
        // Predicated region
        $region13: #{tpu_custom_call.1} parent=11 // pred_check
          %p225 = pneg %p77
        $region14: #{tpu_custom_call.1} parent=11 // pred_check_branch
          %227 = sbr.rel (%p225) target = $region16
        $region15: #{tpu_custom_call.1} parent=11 // pred_region
          _
        $region16: #{tpu_custom_call.1} parent=11 // pred_fallthru
          _
        // Predicated region
        $region17: #{tpu_custom_call.1} parent=11 // pred_check
          %p228 = pneg %p98
        $region18: #{tpu_custom_call.1} parent=11 // pred_check_branch
          %230 = sbr.rel (%p228) target = $region20
        $region19: #{tpu_custom_call.1} parent=11 // pred_region
          _
        $region20: #{tpu_custom_call.1} parent=11 // pred_fallthru
          _
        // Predicated region
        $region21: #{tpu_custom_call.1} parent=11 // pred_check
          %p231 = pneg %p119
        $region22: #{tpu_custom_call.1} parent=11 // pred_check_branch
          %233 = sbr.rel (%p231) target = $region24
        $region23: #{tpu_custom_call.1} parent=11 // pred_region
          _
        $region24: #{tpu_custom_call.1} parent=11 // pred_fallthru
          _
        // Predicated region
        $region25: #{tpu_custom_call.1} parent=11 // pred_check
          %p234 = pneg %p140
        $region26: #{tpu_custom_call.1} parent=11 // pred_check_branch
          %236 = sbr.rel (%p234) target = $region28
        $region27: #{tpu_custom_call.1} parent=11 // pred_region
          _
        $region28: #{tpu_custom_call.1} parent=11 // pred_fallthru
          _
        // Predicated region
        $region29: #{tpu_custom_call.1} parent=11 // pred_check
          %p237 = pneg %p161
        $region30: #{tpu_custom_call.1} parent=11 // pred_check_branch
          %239 = sbr.rel (%p237) target = $region32
        $region31: #{tpu_custom_call.1} parent=11 // pred_region
          _
        $region32: #{tpu_custom_call.1} parent=11 // pred_fallthru
          _
        // Predicated region
        $region33: #{tpu_custom_call.1} parent=11 // pred_check
          %p240 = pneg %p182
        $region34: #{tpu_custom_call.1} parent=11 // pred_check_branch
          %242 = sbr.rel (%p240) target = $region36
        $region35: #{tpu_custom_call.1} parent=11 // pred_region
          _
        $region36: #{tpu_custom_call.1} parent=11 // pred_fallthru
          _
      $region12: #{tpu_custom_call.1} parent=5 // pred_fallthru
        _
      %p243 = scmp.lt.s32.totalorder %s16, 2
      // Predicated region
      $region37: #{tpu_custom_call.1} parent=5 // pred_check
        %p244 = pneg %p243
      $region38: #{tpu_custom_call.1} parent=5 // pred_check_branch
        %246 = sbr.rel (%p244) target = $region40
      $region39: #{tpu_custom_call.1} parent=5 // pred_region
        // Predicated region
        $region41: #{tpu_custom_call.1} parent=39 // pred_check
          %p247 = pneg %p50
        $region42: #{tpu_custom_call.1} parent=39 // pred_check_branch
          %249 = sbr.rel (%p247) target = $region44
        $region43: #{tpu_custom_call.1} parent=39 // pred_region
          %p250 = scmp.lt.s32.totalorder %s23, 1
          %s251 = scalar_select %p250, %s23, 1
          %p252 = scmp.lt.s32.totalorder %s24, 0
          %s253 = scalar_select %p252, %s24, 0
          %s254 = smul.addr %s251, 4
          %s255 = sadd.s32 %s253, %s254
          %s256 = smul.addr %s255, 8
          %s257 = scalar_lea.vmem %s0, %s256
        $region44: #{tpu_custom_call.1} parent=39 // pred_fallthru
          _
      $region40: #{tpu_custom_call.1} parent=5 // pred_fallthru
        _
      %p258 = scmp.le.s32.totalorder 1, %s16
      %p259 = scmp.lt.s32.totalorder %s16, 3
      %p260 = pnand %p258, %p259
      %p261 = pneg %p260
      // Predicated region
      $region45: #{tpu_custom_call.1} parent=5 // pred_check
        _
      $region46: #{tpu_custom_call.1} parent=5 // pred_check_branch
        %263 = sbr.rel (%p260) target = $region48
      $region47: #{tpu_custom_call.1} parent=5 // pred_region
        %s264 = ssub.s32 %s16, 1
        %p265 = scmp.lt.s32.totalorder %s25, 1
        %s266 = scalar_select %p265, %s25, 1
        %p267 = scmp.lt.s32.totalorder %s26, 0
        %s268 = scalar_select %p267, %s26, 0
        %s269 = smul.addr %s266, 4
        %s270 = sadd.s32 %s268, %s269
        %s271 = smul.addr %s270, 8
        %s272 = scalar_lea.vmem %s0, %s271
        %p273 = pneg %p56
        %p274 = pneg %p53
        %p275 = pneg %p77
        %p276 = pneg %p74
        %p277 = pneg %p98
        %p278 = pneg %p95
        %p279 = pneg %p119
        %p280 = pneg %p116
        %p281 = pneg %p140
        %p282 = pneg %p137
        %p283 = pneg %p161
        %p284 = pneg %p158
        %p285 = pneg %p182
        %p286 = pneg %p179
        %p287 = pneg %p210
        %p288 = pneg %p207
        %s289 = sand.u32 %s197, 1
        %s290 = scalar_lea.sflag [#allocation3], %s289
        %s291 = sand.u32 %s197, 1
        %s292 = smul.addr %s291, 32
        %s293 = scalar_lea.vmem [#allocation2], %s292
        %p294 = scmp.lt.s32.totalorder %s25, 1
        %s295 = scalar_select %p294, %s25, 1
        %p296 = scmp.lt.s32.totalorder %s26, 0
        %s297 = scalar_select %p296, %s26, 0
        %s298 = smul.addr %s295, 4
        %s299 = sadd.s32 %s297, %s298
        %s300 = smul.addr %s299, 8
        %s301 = scalar_lea.vmem %s0, %s300
        %v302 = vld [vmem:[%s301] sm:$0xff]
        %v303 = vld [vmem:[%s301 + $0x8] sm:$0xff]
        %v304 = vld [vmem:[%s301 + $0x10] sm:$0xff]
        %v305 = vld [vmem:[%s301 + $0x18] sm:$0xff]
        %v306 = vld [vmem:[%s5] sm:$0xff]
        %v307 = vld [vmem:[%s5 + $0x8] sm:$0xff]
        %v308 = vld [vmem:[%s5 + $0x10] sm:$0xff]
        %v309 = vld [vmem:[%s5 + $0x18] sm:$0xff]
        %v310 = vld [vmem:[%s5 + $0x20] sm:$0xff]
        %v311 = vld [vmem:[%s5 + $0x28] sm:$0xff]
        %v312 = vld [vmem:[%s5 + $0x30] sm:$0xff]
        %v313 = vld [vmem:[%s5 + $0x38] sm:$0xff]
        %v314 = vld [vmem:[%s5 + $0x40] sm:$0xff]
        %v315 = vld [vmem:[%s5 + $0x48] sm:$0xff]
        %v316 = vld [vmem:[%s5 + $0x50] sm:$0xff]
        %v317 = vld [vmem:[%s5 + $0x58] sm:$0xff]
        %v318 = vld [vmem:[%s5 + $0x60] sm:$0xff]
        %v319 = vld [vmem:[%s5 + $0x68] sm:$0xff]
        %v320 = vld [vmem:[%s5 + $0x70] sm:$0xff]
        %v321 = vld [vmem:[%s5 + $0x78] sm:$0xff]
        %322 = vmatprep.subr.mxu0 0.0
        %323 = vmatpush1.msra.mxu0 %v321
        %324 = vmatprep.subr.mxu0 0.0
        %325 = vmatpush1.msra.mxu0 %v320
        %326 = vmatprep.subr.mxu0 0.0
        %327 = vmatpush1.msra.mxu0 %v319
        %328 = vmatprep.subr.mxu0 0.0
        %329 = vmatpush1.msra.mxu0 %v318
        %330 = vmatprep.subr.mxu0 0.0
        %331 = vmatpush1.msra.mxu0 %v317
        %332 = vmatprep.subr.mxu0 0.0
        %333 = vmatpush1.msra.mxu0 %v316
        %334 = vmatprep.subr.mxu0 0.0
        %335 = vmatpush1.msra.mxu0 %v315
        %336 = vmatprep.subr.mxu0 0.0
        %337 = vmatpush1.msra.mxu0 %v314
        %338 = vmatprep.subr.mxu0 0.0
        %339 = vmatpush1.msra.mxu0 %v313
        %340 = vmatprep.subr.mxu0 0.0
        %341 = vmatpush1.msra.mxu0 %v312
        %342 = vmatprep.subr.mxu0 0.0
        %343 = vmatpush1.msra.mxu0 %v311
        %344 = vmatprep.subr.mxu0 0.0
        %345 = vmatpush1.msra.mxu0 %v310
        %346 = vmatprep.subr.mxu0 0.0
        %347 = vmatpush1.msra.mxu0 %v309
        %348 = vmatprep.subr.mxu0 0.0
        %349 = vmatpush1.msra.mxu0 %v308
        %350 = vmatprep.subr.mxu0 0.0
        %351 = vmatpush1.msra.mxu0 %v307
        %352 = vmatprep.subr.mxu0 0.0
        %353 = vmatpush1.msra.mxu0 %v306
        %354 = vmatprep.subr.mxu0 0.0
        %355 = vmatpush2.msra.mxu0 0.0
        %356 = vmatprep.subr.mxu0 0.0
        %357 = vmatpush2.msra.mxu0 0.0
        %358 = vmatprep.subr.mxu0 0.0
        %359 = vmatpush2.msra.mxu0 0.0
        %360 = vmatprep.subr.mxu0 0.0
        %361 = vmatpush2.msra.mxu0 0.0
        %362 = vmatprep.subr.mxu0 0.0
        %363 = vmatpush2.msra.mxu0 0.0
        %364 = vmatprep.subr.mxu0 0.0
        %365 = vmatpush2.msra.mxu0 0.0
        %366 = vmatprep.subr.mxu0 0.0
        %367 = vmatpush2.msra.mxu0 0.0
        %368 = vmatprep.subr.mxu0 0.0
        %369 = vmatpush2.msra.mxu0 0.0
        %370 = vmatprep.subr.mxu0 0.0
        %371 = vmatpush2.msra.mxu0 0.0
        %372 = vmatprep.subr.mxu0 0.0
        %373 = vmatpush2.msra.mxu0 0.0
        %374 = vmatprep.subr.mxu0 0.0
        %375 = vmatpush2.msra.mxu0 0.0
        %376 = vmatprep.subr.mxu0 0.0
        %377 = vmatpush2.msra.mxu0 0.0
        %378 = vmatprep.subr.mxu0 0.0
        %379 = vmatpush2.msra.mxu0 0.0
        %380 = vmatprep.subr.mxu0 0.0
        %381 = vmatpush2.msra.mxu0 0.0
        %382 = vmatprep.subr.mxu0 0.0
        %383 = vmatpush2.msra.mxu0 0.0
        %384 = vmatprep.subr.mxu0 0.0
        %385 = vmatpush2.msra.mxu0 0.0
        %386 = vmatprep.mubr.f32.mxu0 0.0
        %387 = vmatmul.mubr.f32.gmra.mxu0 %v302
        %v388 = vpop.f32.mrf.mxu0
        %v389 = vadd.f32 0.0, %v388
        %v390 = vpop.f32.mrf.mxu0
        %391 = vmatprep.mubr.f32.mxu0 0.0
        %392 = vmatmul.mubr.f32.gmra.mxu0 %v303
        %v393 = vpop.f32.mrf.mxu0
        %v394 = vadd.f32 0.0, %v393
        %v395 = vpop.f32.mrf.mxu0
        %396 = vmatprep.mubr.f32.mxu0 0.0
        %397 = vmatmul.mubr.f32.gmra.mxu0 %v304
        %v398 = vpop.f32.mrf.mxu0
        %v399 = vadd.f32 0.0, %v398
        %v400 = vpop.f32.mrf.mxu0
        %401 = vmatprep.mubr.f32.mxu0 0.0
        %402 = vmatmul.mubr.f32.gmra.mxu0 %v305
        %v403 = vpop.f32.mrf.mxu0
        %v404 = vadd.f32 0.0, %v403
        %v405 = vpop.f32.mrf.mxu0
        %406 = vdwg.mxu0
        %v407 = vld [vmem:[%s1] sm:$0x3]
        %v408 = vld [vmem:[%s2] sm:$0x3]
        %410 = vset.pattern.permute.xlu0 0
        %411 = vperm.xlu0 %410, %v408
        %v412 = vpop.permute.xlu0 %411
        %vm414 = vcmask 261120
        %v416 = vsel %vm414, %v407, 0
        %418 = vmatprep.subr.mxu0 0.0
        %419 = vmatpush1.msra.mxu0 0.0
        %420 = vmatprep.subr.mxu0 0.0
        %421 = vmatpush1.msra.mxu0 0.0
        %422 = vmatprep.subr.mxu0 0.0
        %423 = vmatpush1.msra.mxu0 0.0
        %424 = vmatprep.subr.mxu0 0.0
        %425 = vmatpush1.msra.mxu0 0.0
        %426 = vmatprep.subr.mxu0 0.0
        %427 = vmatpush1.msra.mxu0 0.0
        %428 = vmatprep.subr.mxu0 0.0
        %429 = vmatpush1.msra.mxu0 0.0
        %430 = vmatprep.subr.mxu0 0.0
        %431 = vmatpush1.msra.mxu0 0.0
        %432 = vmatprep.subr.mxu0 0.0
        %433 = vmatpush1.msra.mxu0 0.0
        %434 = vmatprep.subr.mxu0 0.0
        %435 = vmatpush1.msra.mxu0 0.0
        %436 = vmatprep.subr.mxu0 0.0
        %437 = vmatpush1.msra.mxu0 0.0
        %438 = vmatprep.subr.mxu0 0.0
        %439 = vmatpush1.msra.mxu0 0.0
        %440 = vmatprep.subr.mxu0 0.0
        %441 = vmatpush1.msra.mxu0 0.0
        %442 = vmatprep.subr.mxu0 0.0
        %443 = vmatpush1.msra.mxu0 %v404
        %444 = vmatprep.subr.mxu0 0.0
        %445 = vmatpush1.msra.mxu0 %v399
        %446 = vmatprep.subr.mxu0 0.0
        %447 = vmatpush1.msra.mxu0 %v394
        %448 = vmatprep.subr.mxu0 0.0
        %449 = vmatpush1.msra.mxu0 %v389
        %450 = vmatprep.subr.mxu0 0.0
        %451 = vmatpush2.msra.mxu0 0.0
        %452 = vmatprep.subr.mxu0 0.0
        %453 = vmatpush2.msra.mxu0 0.0
        %454 = vmatprep.subr.mxu0 0.0
        %455 = vmatpush2.msra.mxu0 0.0
        %456 = vmatprep.subr.mxu0 0.0
        %457 = vmatpush2.msra.mxu0 0.0
        %458 = vmatprep.subr.mxu0 0.0
        %459 = vmatpush2.msra.mxu0 0.0
        %460 = vmatprep.subr.mxu0 0.0
        %461 = vmatpush2.msra.mxu0 0.0
        %462 = vmatprep.subr.mxu0 0.0
        %463 = vmatpush2.msra.mxu0 0.0
        %464 = vmatprep.subr.mxu0 0.0
        %465 = vmatpush2.msra.mxu0 0.0
        %466 = vmatprep.subr.mxu0 0.0
        %467 = vmatpush2.msra.mxu0 0.0
        %468 = vmatprep.subr.mxu0 0.0
        %469 = vmatpush2.msra.mxu0 0.0
        %470 = vmatprep.subr.mxu0 0.0
        %471 = vmatpush2.msra.mxu0 0.0
        %472 = vmatprep.subr.mxu0 0.0
        %473 = vmatpush2.msra.mxu0 0.0
        %474 = vmatprep.subr.mxu0 0.0
        %475 = vmatpush2.msra.mxu0 0.0
        %476 = vmatprep.subr.mxu0 0.0
        %477 = vmatpush2.msra.mxu0 0.0
        %478 = vmatprep.subr.mxu0 0.0
        %479 = vmatpush2.msra.mxu0 0.0
        %480 = vmatprep.subr.mxu0 0.0
        %481 = vmatpush2.msra.mxu0 0.0
        %482 = vmatprep.mubr.f32.mxu0 0.0
        %483 = vmatmul.mubr.f32.gmra.mxu0 %v416
        %v484 = vpop.f32.mrf.mxu0
        %v485 = vadd.f32 %v412, %v484
        %v486 = vpop.f32.mrf.mxu0
        %487 = vdwg.mxu0
        %vm488 = vcmp.ge.f32.partialorder %v485, 0.0
        %v489 = vmul.f32 %v485, 0.01
        %v490 = vsel %vm488, %v485, %v489
        %v491 = vld [vmem:[%s3] sm:$0xff]
        %v492 = vld [vmem:[%s3 + $0x8] sm:$0xff]
        %v493 = vld [vmem:[%s3 + $0x10] sm:$0xff]
        %v494 = vld [vmem:[%s3 + $0x18] sm:$0xff]
        %v495 = vld [vmem:[%s4] sm:$0xff]
        %v496 = vld [vmem:[%s4 + $0x8] sm:$0xff]
        %v497 = vld [vmem:[%s4 + $0x10] sm:$0xff]
        %v498 = vld [vmem:[%s4 + $0x18] sm:$0xff]
        %500 = vset.pattern.permute.xlu0 0
        %501 = vperm.xlu0 %500, %v495
        %v502 = vpop.permute.xlu0 %501
        %505 = vset.pattern.permute.xlu0 0
        %506 = vperm.xlu0 %505, %v496
        %v507 = vpop.permute.xlu0 %506
        %510 = vset.pattern.permute.xlu0 0
        %511 = vperm.xlu0 %510, %v497
        %v512 = vpop.permute.xlu0 %511
        %515 = vset.pattern.permute.xlu0 0
        %516 = vperm.xlu0 %515, %v498
        %v517 = vpop.permute.xlu0 %516
        %vm519 = vcmask 15360
        %v521 = vsel %vm519, %v491, 0
        %v524 = vsel %vm519, %v492, 0
        %v527 = vsel %vm519, %v493, 0
        %v530 = vsel %vm519, %v494, 0
        %vm532 = vcmask 1041408
        %v534 = vsel %vm532, %v490, 0
        %536 = vmatprep.subr.mxu0 0.0
        %537 = vmatpush1.msra.mxu0 0.0
        %538 = vmatprep.subr.mxu0 0.0
        %539 = vmatpush1.msra.mxu0 0.0
        %540 = vmatprep.subr.mxu0 0.0
        %541 = vmatpush1.msra.mxu0 0.0
        %542 = vmatprep.subr.mxu0 0.0
        %543 = vmatpush1.msra.mxu0 0.0
        %544 = vmatprep.subr.mxu0 0.0
        %545 = vmatpush1.msra.mxu0 0.0
        %546 = vmatprep.subr.mxu0 0.0
        %547 = vmatpush1.msra.mxu0 0.0
        %548 = vmatprep.subr.mxu0 0.0
        %549 = vmatpush1.msra.mxu0 0.0
        %550 = vmatprep.subr.mxu0 0.0
        %551 = vmatpush1.msra.mxu0 0.0
        %552 = vmatprep.subr.mxu0 0.0
        %553 = vmatpush1.msra.mxu0 0.0
        %554 = vmatprep.subr.mxu0 0.0
        %555 = vmatpush1.msra.mxu0 0.0
        %556 = vmatprep.subr.mxu0 0.0
        %557 = vmatpush1.msra.mxu0 0.0
        %558 = vmatprep.subr.mxu0 0.0
        %559 = vmatpush1.msra.mxu0 0.0
        %560 = vmatprep.subr.mxu0 0.0
        %561 = vmatpush1.msra.mxu0 0.0
        %562 = vmatprep.subr.mxu0 0.0
        %563 = vmatpush1.msra.mxu0 0.0
        %564 = vmatprep.subr.mxu0 0.0
        %565 = vmatpush1.msra.mxu0 0.0
        %566 = vmatprep.subr.mxu0 0.0
        %567 = vmatpush1.msra.mxu0 %v534
        %568 = vmatprep.subr.mxu0 0.0
        %569 = vmatpush2.msra.mxu0 0.0
        %570 = vmatprep.subr.mxu0 0.0
        %571 = vmatpush2.msra.mxu0 0.0
        %572 = vmatprep.subr.mxu0 0.0
        %573 = vmatpush2.msra.mxu0 0.0
        %574 = vmatprep.subr.mxu0 0.0
        %575 = vmatpush2.msra.mxu0 0.0
        %576 = vmatprep.subr.mxu0 0.0
        %577 = vmatpush2.msra.mxu0 0.0
        %578 = vmatprep.subr.mxu0 0.0
        %579 = vmatpush2.msra.mxu0 0.0
        %580 = vmatprep.subr.mxu0 0.0
        %581 = vmatpush2.msra.mxu0 0.0
        %582 = vmatprep.subr.mxu0 0.0
        %583 = vmatpush2.msra.mxu0 0.0
        %584 = vmatprep.subr.mxu0 0.0
        %585 = vmatpush2.msra.mxu0 0.0
        %586 = vmatprep.subr.mxu0 0.0
        %587 = vmatpush2.msra.mxu0 0.0
        %588 = vmatprep.subr.mxu0 0.0
        %589 = vmatpush2.msra.mxu0 0.0
        %590 = vmatprep.subr.mxu0 0.0
        %591 = vmatpush2.msra.mxu0 0.0
        %592 = vmatprep.subr.mxu0 0.0
        %593 = vmatpush2.msra.mxu0 0.0
        %594 = vmatprep.subr.mxu0 0.0
        %595 = vmatpush2.msra.mxu0 0.0
        %596 = vmatprep.subr.mxu0 0.0
        %597 = vmatpush2.msra.mxu0 0.0
        %598 = vmatprep.subr.mxu0 0.0
        %599 = vmatpush2.msra.mxu0 0.0
        %600 = vmatprep.mubr.f32.mxu0 0.0
        %601 = vmatmul.mubr.f32.gmra.mxu0 %v521
        %v602 = vpop.f32.mrf.mxu0
        %v603 = vadd.f32 %v502, %v602
        %v604 = vpop.f32.mrf.mxu0
        %605 = vmatprep.mubr.f32.mxu0 0.0
        %606 = vmatmul.mubr.f32.gmra.mxu0 %v524
        %v607 = vpop.f32.mrf.mxu0
        %v608 = vadd.f32 %v507, %v607
        %v609 = vpop.f32.mrf.mxu0
        %610 = vmatprep.mubr.f32.mxu0 0.0
        %611 = vmatmul.mubr.f32.gmra.mxu0 %v527
        %v612 = vpop.f32.mrf.mxu0
        %v613 = vadd.f32 %v512, %v612
        %v614 = vpop.f32.mrf.mxu0
        %615 = vmatprep.mubr.f32.mxu0 0.0
        %616 = vmatmul.mubr.f32.gmra.mxu0 %v530
        %v617 = vpop.f32.mrf.mxu0
        %v618 = vadd.f32 %v517, %v617
        %v619 = vpop.f32.mrf.mxu0
        %620 = vdwg.mxu0
        %v621 = vxor.u32 %v603, 2147483648
        %v622 = vxor.u32 %v608, 2147483648
        %v623 = vxor.u32 %v613, 2147483648
        %v624 = vxor.u32 %v618, 2147483648
        %v625 = vmul.f32 %v621, 1.442695
        %v626 = vpow.pop %v625
        %v627 = vmul.f32 %v622, 1.442695
        %v628 = vpow.pop %v627
        %v629 = vmul.f32 %v623, 1.442695
        %v630 = vpow.pop %v629
        %v631 = vmul.f32 %v624, 1.442695
        %v632 = vpow.pop %v631
        %v633 = vadd.f32 %v626, 1.0
        %v634 = vadd.f32 %v628, 1.0
        %v635 = vadd.f32 %v630, 1.0
        %v636 = vadd.f32 %v632, 1.0
        %v637 = vrcp.pop %v633
        %v638 = vmul.f32 1.0, %v637
        %v639 = vrcp.pop %v634
        %v640 = vmul.f32 1.0, %v639
        %v641 = vrcp.pop %v635
        %v642 = vmul.f32 1.0, %v641
        %v643 = vrcp.pop %v636
        %v644 = vmul.f32 1.0, %v643
        %v645 = vld [vmem:[%s6] sm:$0xff]
        %v646 = vld [vmem:[%s6 + $0x8] sm:$0xff]
        %vm647 = vcmask 130048
        %v649 = vsel %vm647, %v638, 0
        %v652 = vsel %vm647, %v640, 0
        %v655 = vsel %vm647, %v642, 0
        %v658 = vsel %vm647, %v644, 0
        %660 = vmatprep.subr.mxu0 0.0
        %661 = vmatpush1.msra.mxu0 0.0
        %662 = vmatprep.subr.mxu0 0.0
        %663 = vmatpush1.msra.mxu0 0.0
        %664 = vmatprep.subr.mxu0 0.0
        %665 = vmatpush1.msra.mxu0 0.0
        %666 = vmatprep.subr.mxu0 0.0
        %667 = vmatpush1.msra.mxu0 0.0
        %668 = vmatprep.subr.mxu0 0.0
        %669 = vmatpush1.msra.mxu0 0.0
        %670 = vmatprep.subr.mxu0 0.0
        %671 = vmatpush1.msra.mxu0 0.0
        %672 = vmatprep.subr.mxu0 0.0
        %673 = vmatpush1.msra.mxu0 0.0
        %674 = vmatprep.subr.mxu0 0.0
        %675 = vmatpush1.msra.mxu0 0.0
        %676 = vmatprep.subr.mxu0 0.0
        %677 = vmatpush1.msra.mxu0 0.0
        %678 = vmatprep.subr.mxu0 0.0
        %679 = vmatpush1.msra.mxu0 0.0
        %680 = vmatprep.subr.mxu0 0.0
        %681 = vmatpush1.msra.mxu0 0.0
        %682 = vmatprep.subr.mxu0 0.0
        %683 = vmatpush1.msra.mxu0 0.0
        %684 = vmatprep.subr.mxu0 0.0
        %685 = vmatpush1.msra.mxu0 0.0
        %686 = vmatprep.subr.mxu0 0.0
        %687 = vmatpush1.msra.mxu0 0.0
        %688 = vmatprep.subr.mxu0 0.0
        %689 = vmatpush1.msra.mxu0 %v646
        %690 = vmatprep.subr.mxu0 0.0
        %691 = vmatpush1.msra.mxu0 %v645
        %692 = vmatprep.subr.mxu0 0.0
        %693 = vmatpush2.msra.mxu0 0.0
        %694 = vmatprep.subr.mxu0 0.0
        %695 = vmatpush2.msra.mxu0 0.0
        %696 = vmatprep.subr.mxu0 0.0
        %697 = vmatpush2.msra.mxu0 0.0
        %698 = vmatprep.subr.mxu0 0.0
        %699 = vmatpush2.msra.mxu0 0.0
        %700 = vmatprep.subr.mxu0 0.0
        %701 = vmatpush2.msra.mxu0 0.0
        %702 = vmatprep.subr.mxu0 0.0
        %703 = vmatpush2.msra.mxu0 0.0
        %704 = vmatprep.subr.mxu0 0.0
        %705 = vmatpush2.msra.mxu0 0.0
        %706 = vmatprep.subr.mxu0 0.0
        %707 = vmatpush2.msra.mxu0 0.0
        %708 = vmatprep.subr.mxu0 0.0
        %709 = vmatpush2.msra.mxu0 0.0
        %710 = vmatprep.subr.mxu0 0.0
        %711 = vmatpush2.msra.mxu0 0.0
        %712 = vmatprep.subr.mxu0 0.0
        %713 = vmatpush2.msra.mxu0 0.0
        %714 = vmatprep.subr.mxu0 0.0
        %715 = vmatpush2.msra.mxu0 0.0
        %716 = vmatprep.subr.mxu0 0.0
        %717 = vmatpush2.msra.mxu0 0.0
        %718 = vmatprep.subr.mxu0 0.0
        %719 = vmatpush2.msra.mxu0 0.0
        %720 = vmatprep.subr.mxu0 0.0
        %721 = vmatpush2.msra.mxu0 0.0
        %722 = vmatprep.subr.mxu0 0.0
        %723 = vmatpush2.msra.mxu0 0.0
        %724 = vmatprep.mubr.f32.mxu0 0.0
        %725 = vmatmul.mubr.f32.gmra.mxu0 %v649
        %v726 = vpop.f32.mrf.mxu0
        %v727 = vadd.f32 0.0, %v726
        %v728 = vpop.f32.mrf.mxu0
        %729 = vmatprep.mubr.f32.mxu0 0.0
        %730 = vmatmul.mubr.f32.gmra.mxu0 %v652
        %v731 = vpop.f32.mrf.mxu0
        %v732 = vadd.f32 0.0, %v731
        %v733 = vpop.f32.mrf.mxu0
        %734 = vmatprep.mubr.f32.mxu0 0.0
        %735 = vmatmul.mubr.f32.gmra.mxu0 %v655
        %v736 = vpop.f32.mrf.mxu0
        %v737 = vadd.f32 0.0, %v736
        %v738 = vpop.f32.mrf.mxu0
        %739 = vmatprep.mubr.f32.mxu0 0.0
        %740 = vmatmul.mubr.f32.gmra.mxu0 %v658
        %v741 = vpop.f32.mrf.mxu0
        %v742 = vadd.f32 0.0, %v741
        %v743 = vpop.f32.mrf.mxu0
        %744 = vdwg.mxu0
        %v745 = vmul.f32 %v302, %v727
        %v746 = vmul.f32 %v303, %v732
        %v747 = vmul.f32 %v304, %v737
        %v748 = vmul.f32 %v305, %v742
        %749 = vst [vmem:[%s293] sm:$0xff] %v745
        %750 = vst [vmem:[%s293 + $0x8] sm:$0xff] %v746
        %751 = vst [vmem:[%s293 + $0x10] sm:$0xff] %v747
        %752 = vst [vmem:[%s293 + $0x18] sm:$0xff] %v748
        %s753 = sand.u32 %s197, 1
        %s754 = scalar_lea.sflag [#allocation3], %s753
        %s755 = sand.u32 %s197, 1
        %s756 = smul.addr %s755, 32
        %s757 = scalar_lea.vmem [#allocation2], %s756
        // Predicated region
        $region49: #{tpu_custom_call.1} parent=47 // pred_check
          %p758 = pneg %p207
        $region50: #{tpu_custom_call.1} parent=47 // pred_check_branch
          %760 = sbr.rel (%p758) target = $region52
        $region51: #{tpu_custom_call.1} parent=47 // pred_region
          %s762 = ssub.s32 512, 512
          %763 = vsyncadd %s754, %s762
          %s764 = smul.addr %s25, 4
          %s765 = sadd.s32 %s26, %s764
          %s766 = smul.addr %s765, 128
          %s767 = scalar_lea.hbm %s7, %s766
          %s768 = sshll.u32 %s757, 4
          %s769 = int_to_ptr.vmem [resolvable:$true] %s768
          %774 = dma.vmem_to_hbm [thread:$0]  %s769, 512, %s767, %s754, 128, 128, 8
        $region52: #{tpu_custom_call.1} parent=47 // pred_fallthru
          _
      $region48: #{tpu_custom_call.1} parent=5 // pred_fallthru
        _
      %p775 = scmp.le.s32.totalorder 2, %s16
      // Predicated region
      $region53: #{tpu_custom_call.1} parent=5 // pred_check
        %p776 = pneg %p775
      $region54: #{tpu_custom_call.1} parent=5 // pred_check_branch
        %778 = sbr.rel (%p776) target = $region56
      $region55: #{tpu_custom_call.1} parent=5 // pred_region
        %s779 = ssub.s32 %s16, 2
        // Predicated region
        $region57: #{tpu_custom_call.1} parent=55 // pred_check
          %p780 = pneg %p213
        $region58: #{tpu_custom_call.1} parent=55 // pred_check_branch
          %782 = sbr.rel (%p780) target = $region60
        $region59: #{tpu_custom_call.1} parent=55 // pred_region
          %s783 = sand.u32 %s198, 1
          %s784 = scalar_lea.sflag [#allocation3], %s783
          %s785 = sand.u32 %s198, 1
          %s786 = smul.addr %s785, 32
          %s787 = scalar_lea.vmem [#allocation2], %s786
          %788 = dma.done %s784, 512
        $region60: #{tpu_custom_call.1} parent=55 // pred_fallthru
          _
      $region56: #{tpu_custom_call.1} parent=5 // pred_fallthru
        _
    $region6: #{tpu_custom_call.1} parent=1 // loop_footer
      %s20 = sadd.s32 1, %s16
    $region7: #{tpu_custom_call.1} parent=1 // loop_footer_branch
      %15 = sbr.rel target = $region3
    $region8: #{tpu_custom_call.1} parent=1 // loop_exit
      _
    %789 = vsyncpa [#allocation3], 1
    %s790 = scalar_lea.sflag [#allocation3], 1
    %791 = vsyncpa %s790, 1

</llo_original>
